<compile_context>
chip_gen: v6e
topology: v6e:2x2x1
jax: 0.10.0
libtpu: 0.0.40
codegen_flags: <defaults>
</compile_context>

<pallas_src>
import functools

import jax
import jax.numpy as jnp
from jax.experimental import pallas as pl
from jax.experimental.pallas import tpu as pltpu  # noqa: F401  (TPU backend selection)


def _round_up(v, m):
    return (v + m - 1) // m * m


# ---------------------------------------------------------------------------
# Fused Pallas kernel: entire forward in one program; all intermediates stay in
# vregs/VMEM, only the final (lane-dense 128-wide) result is written back.
# ---------------------------------------------------------------------------
def _gin_fused_kernel(x_ref, adj_ref, w_sq_ref, w_out_ref, b_ref, o_ref,
                      *, num_layers, dim_emb, eps):
    f32, bf16 = jnp.float32, jnp.bfloat16
    d = dim_emb

    # Packed biases, one DMA: row 0 = b_in1, row 1 = b_in2,
    # rows 2..2+L-1 = b_gin_i (lanes [0:d]), row 2+L = b_out (full lane width).
    B = b_ref[...]                                             # (8, 128) f32

    # node_features_transformation: Linear -> ReLU -> Linear -> ReLU
    h = jnp.dot(x_ref[...], w_sq_ref[0], preferred_element_type=f32) + B[0:1, :d]
    h = jnp.maximum(h, 0.0)
    h = jnp.dot(h.astype(bf16), w_sq_ref[1], preferred_element_type=f32) + B[1:2, :d]
    h = jnp.maximum(h, 0.0)

    adj = adj_ref[...]        # (n, n) bf16; integer multiplicities -> exact in bf16
    acc = h                   # running 'sum' combine (xs[0] = transformed input)

    # GINConv layers:  h <- relu( (A @ h + (1 + eps) * h) @ W_i + b_i )
    for i in range(num_layers):                 # tiny static loop, unrolled in trace
        agg = jnp.dot(adj, h.astype(bf16), preferred_element_type=f32)
        hlin = agg + h if eps == 0.0 else agg + (1.0 + eps) * h  # eps==0 specialized
        h = jnp.dot(hlin.astype(bf16), w_sq_ref[2 + i],
                    preferred_element_type=f32) + B[2 + i:3 + i, :d]
        h = jnp.maximum(h, 0.0)
        acc = acc + h

    # TODO(synk): Dropout is identity at inference; training-mode dropout not implemented.
    out = (jnp.dot(acc.astype(bf16), w_out_ref[...], preferred_element_type=f32)
           + B[2 + num_layers:3 + num_layers, :])
    o_ref[...] = out.astype(o_ref.dtype)


# ---------------------------------------------------------------------------
# One-time parameter packing (hoisted out of the per-call path).
# ---------------------------------------------------------------------------
def pack_params(params, num_layers, dim_features, dim_emb, dim_target):
    d = dim_emb
    t_pad = _round_up(dim_target, 128)          # lane-dense final output width
    # TODO(synk): demo packing assumes dim_features <= dim_embedding <= 128;
    #             otherwise keep w_in1 as a separate input ref.
    assert dim_features <= d <= t_pad

    # All d-wide weights stacked into one (2+L, d, d) bf16 tensor -> single DMA.
    # w_in1's input rows are zero-padded to d (x's feature dim is padded to match,
    # which preserves the math exactly).
    w_in1_p = jnp.pad(params["w_in1"], ((0, d - dim_features), (0, 0)))
    w_sq = jnp.stack(
        [w_in1_p, params["w_in2"]] + [params[f"w_gin{i}"] for i in range(num_layers)]
    ).astype(jnp.bfloat16)

    w_out = jnp.pad(params["w_out"],
                    ((0, 0), (0, t_pad - dim_target))).astype(jnp.bfloat16)

    rows = _round_up(num_layers + 3, 8)
    biases = jnp.zeros((rows, t_pad), jnp.float32)
    biases = biases.at[0, :d].set(params["b_in1"][0])
    biases = biases.at[1, :d].set(params["b_in2"][0])
    for i in range(num_layers):
        biases = biases.at[2 + i, :d].set(params[f"b_gin{i}"][0])
    biases = biases.at[2 + num_layers, :dim_target].set(params["b_out"][0])

    return {"w_sq": w_sq, "w_out": w_out, "biases": biases}


# ---------------------------------------------------------------------------
# Forward wrapper: tiny per-call glue (pad node rows, cast x/adj to bf16),
# one pallas_call, slice out the true-width result.
# ---------------------------------------------------------------------------
@functools.partial(jax.jit, static_argnames=("num_layers", "dim_emb",
                                             "dim_target", "eps"))
def gin_forward(x, adj, packed, *, num_layers, dim_emb, dim_target, eps=0.0):
    n, f = x.shape
    d = dim_emb
    n_pad = _round_up(n, 8)
    t_pad = packed["w_out"].shape[1]

    # Padded node rows give h = relu(bias) != 0, but their adjacency columns are
    # zero so real rows are never contaminated, and the final slice drops them.
    x_p = jnp.pad(x, ((0, n_pad - n), (0, d - f))).astype(jnp.bfloat16)
    adj_p = jnp.pad(adj, ((0, n_pad - n), (0, n_pad - n))).astype(jnp.bfloat16)

    out_pad = pl.pallas_call(
        functools.partial(_gin_fused_kernel, num_layers=num_layers,
                          dim_emb=d, eps=float(eps)),
        out_shape=jax.ShapeDtypeStruct((n_pad, t_pad), jnp.float32),
        # No grid: single program, whole arrays resident in VMEM,
        # no per-step pipeline overhead and no double buffering.
    )(x_p, adj_p, packed["w_sq"], packed["w_out"], packed["biases"])

    return out_pad[:n, :dim_target]


# ---------------------------------------------------------------------------
# Pure-JAX f32 reference (for correctness check)
# ---------------------------------------------------------------------------
def gin_reference(x, adj, params, num_layers, eps=0.0):
    hi = jax.lax.Precision.HIGHEST
    relu = lambda v: jnp.maximum(v, 0.0)
    h = relu(jnp.dot(x, params["w_in1"], precision=hi) + params["b_in1"])
    h = relu(jnp.dot(h, params["w_in2"], precision=hi) + params["b_in2"])
    xs = [h]
    for i in range(num_layers):
        agg = jnp.dot(adj, h, precision=hi)
        h = relu(jnp.dot(agg + (1.0 + eps) * h, params[f"w_gin{i}"], precision=hi)
                 + params[f"b_gin{i}"])
        xs.append(h)
    s = xs[0]
    for t in xs[1:]:
        s = s + t
    return jnp.dot(s, params["w_out"], precision=hi) + params["b_out"]


# ---------------------------------------------------------------------------
# Main
# ---------------------------------------------------------------------------
if __name__ == "__main__":
    key = jax.random.PRNGKey(0)
    N_NODES = 16      # number of graph nodes
    DIM_FEATURES = 8  # raw node feature dim
    DIM_EMB = 32      # dim_embedding
    DIM_TARGET = 4    # dim_target
    NUM_LAYERS = 3    # num_layers
    NUM_EDGES = 40

    keys = jax.random.split(key, 16)

    # Node features and random edge_index (2, E); densify into adjacency A[dst, src].
    x = jax.random.normal(keys[0], (N_NODES, DIM_FEATURES), jnp.float32)
    src = jax.random.randint(keys[1], (NUM_EDGES,), 0, N_NODES)
    dst = jax.random.randint(keys[2], (NUM_EDGES,), 0, N_NODES)
    adj = jnp.zeros((N_NODES, N_NODES), jnp.float32).at[dst, src].add(1.0)

    def init_linear(k, din, dout, scale=0.1):
        kw, kb = jax.random.split(k)
        w = scale * jax.random.normal(kw, (din, dout), jnp.float32)
        b = scale * jax.random.normal(kb, (1, dout), jnp.float32)
        return w, b

    params = {}
    params["w_in1"], params["b_in1"] = init_linear(keys[3], DIM_FEATURES, DIM_EMB)
    params["w_in2"], params["b_in2"] = init_linear(keys[4], DIM_EMB, DIM_EMB)
    for i in range(NUM_LAYERS):
        params[f"w_gin{i}"], params[f"b_gin{i}"] = init_linear(keys[5 + i], DIM_EMB, DIM_EMB)
    params["w_out"], params["b_out"] = init_linear(keys[10], DIM_EMB, DIM_TARGET)

    # One-time parameter packing (pad/stack/bf16-cast hoisted out of the hot path).
    packed = pack_params(params, NUM_LAYERS, DIM_FEATURES, DIM_EMB, DIM_TARGET)
    packed = jax.block_until_ready(packed)

    out = gin_forward(x, adj, packed, num_layers=NUM_LAYERS, dim_emb=DIM_EMB,
                      dim_target=DIM_TARGET, eps=0.0)
    out = jax.block_until_ready(out)
    assert out.shape == (N_NODES, DIM_TARGET), out.shape

    ref = jax.block_until_ready(gin_reference(x, adj, params, NUM_LAYERS, eps=0.0))
    # bf16 matmul operands (f32 accumulation) vs. an f32 HIGHEST-precision reference:
    # slightly relaxed tolerance per the review's re-validation note.
    assert jnp.allclose(out, ref, atol=2e-2, rtol=2e-2), float(jnp.max(jnp.abs(out - ref)))

    print("KERNEL_OK")
</pallas_src>

<mosaic_0001>
module attributes {stable_mosaic.version = 11 : i64} {
  func.func @_gin_fused_kernel(%arg0: memref<16x32xbf16, #tpu.memory_space<vmem>>, %arg1: memref<16x16xbf16, #tpu.memory_space<vmem>>, %arg2: memref<5x32x32xbf16, #tpu.memory_space<vmem>>, %arg3: memref<32x128xbf16, #tpu.memory_space<vmem>>, %arg4: memref<8x128xf32, #tpu.memory_space<vmem>>, %arg5: memref<16x128xf32, #tpu.memory_space<vmem>>) attributes {dimension_semantics = [], scalar_prefetch = 0 : i64, scratch_operands = 0 : i64, tpu.core_type = #tpu.core_type<tc>} {
    %c0 = arith.constant 0 : index
    %c0_0 = arith.constant 0 : index
    %0 = vector.load %arg4[%c0, %c0_0] : memref<8x128xf32, #tpu.memory_space<vmem>>, vector<8x128xf32>
    %c0_1 = arith.constant 0 : index
    %c0_2 = arith.constant 0 : index
    %1 = vector.load %arg0[%c0_1, %c0_2] : memref<16x32xbf16, #tpu.memory_space<vmem>>, vector<16x32xbf16>
    %c0_3 = arith.constant 0 : index
    %c0_4 = arith.constant 0 : index
    %c0_5 = arith.constant 0 : index
    %2 = vector.load %arg2[%c0_3, %c0_4, %c0_5] : memref<5x32x32xbf16, #tpu.memory_space<vmem>>, vector<1x32x32xbf16>
    %3 = vector.shape_cast %2 : vector<1x32x32xbf16> to vector<32x32xbf16>
    %cst = arith.constant dense<0.000000e+00> : vector<16x32xf32>
    %4 = tpu.matmul %1, %3, %cst {dimension_numbers = #tpu.dot_dimension_numbers<[1], [0], [0], [1], [0, 0, 1, 1], [], []>} : vector<16x32xbf16>, vector<32x32xbf16>, vector<16x32xf32> -> vector<16x32xf32>
    %5 = vector.extract_strided_slice %0 {offsets = [0, 0], sizes = [1, 32], strides = [1, 1]} : vector<8x128xf32> to vector<1x32xf32>
    %6 = vector.broadcast %5 : vector<1x32xf32> to vector<16x32xf32>
    %7 = arith.addf %4, %6 : vector<16x32xf32>
    %cst_6 = arith.constant 0.000000e+00 : f32
    %8 = vector.broadcast %cst_6 : f32 to vector<16x32xf32>
    %9 = arith.maximumf %7, %8 : vector<16x32xf32>
    %10 = arith.truncf %9 : vector<16x32xf32> to vector<16x32xbf16>
    %c1 = arith.constant 1 : index
    %c0_7 = arith.constant 0 : index
    %c0_8 = arith.constant 0 : index
    %11 = vector.load %arg2[%c1, %c0_7, %c0_8] : memref<5x32x32xbf16, #tpu.memory_space<vmem>>, vector<1x32x32xbf16>
    %12 = vector.shape_cast %11 : vector<1x32x32xbf16> to vector<32x32xbf16>
    %cst_9 = arith.constant dense<0.000000e+00> : vector<16x32xf32>
    %13 = tpu.matmul %10, %12, %cst_9 {dimension_numbers = #tpu.dot_dimension_numbers<[1], [0], [0], [1], [0, 0, 1, 1], [], []>} : vector<16x32xbf16>, vector<32x32xbf16>, vector<16x32xf32> -> vector<16x32xf32>
    %14 = vector.extract_strided_slice %0 {offsets = [1, 0], sizes = [1, 32], strides = [1, 1]} : vector<8x128xf32> to vector<1x32xf32>
    %15 = vector.broadcast %14 : vector<1x32xf32> to vector<16x32xf32>
    %16 = arith.addf %13, %15 : vector<16x32xf32>
    %cst_10 = arith.constant 0.000000e+00 : f32
    %17 = vector.broadcast %cst_10 : f32 to vector<16x32xf32>
    %18 = arith.maximumf %16, %17 : vector<16x32xf32>
    %c0_11 = arith.constant 0 : index
    %c0_12 = arith.constant 0 : index
    %19 = vector.load %arg1[%c0_11, %c0_12] : memref<16x16xbf16, #tpu.memory_space<vmem>>, vector<16x16xbf16>
    %20 = arith.truncf %18 : vector<16x32xf32> to vector<16x32xbf16>
    %cst_13 = arith.constant dense<0.000000e+00> : vector<16x32xf32>
    %21 = tpu.matmul %19, %20, %cst_13 {dimension_numbers = #tpu.dot_dimension_numbers<[1], [0], [0], [1], [0, 0, 1, 1], [], []>} : vector<16x16xbf16>, vector<16x32xbf16>, vector<16x32xf32> -> vector<16x32xf32>
    %22 = arith.addf %21, %18 : vector<16x32xf32>
    %23 = arith.truncf %22 : vector<16x32xf32> to vector<16x32xbf16>
    %c2 = arith.constant 2 : index
    %c0_14 = arith.constant 0 : index
    %c0_15 = arith.constant 0 : index
    %24 = vector.load %arg2[%c2, %c0_14, %c0_15] : memref<5x32x32xbf16, #tpu.memory_space<vmem>>, vector<1x32x32xbf16>
    %25 = vector.shape_cast %24 : vector<1x32x32xbf16> to vector<32x32xbf16>
    %cst_16 = arith.constant dense<0.000000e+00> : vector<16x32xf32>
    %26 = tpu.matmul %23, %25, %cst_16 {dimension_numbers = #tpu.dot_dimension_numbers<[1], [0], [0], [1], [0, 0, 1, 1], [], []>} : vector<16x32xbf16>, vector<32x32xbf16>, vector<16x32xf32> -> vector<16x32xf32>
    %27 = vector.extract_strided_slice %0 {offsets = [2, 0], sizes = [1, 32], strides = [1, 1]} : vector<8x128xf32> to vector<1x32xf32>
    %28 = vector.broadcast %27 : vector<1x32xf32> to vector<16x32xf32>
    %29 = arith.addf %26, %28 : vector<16x32xf32>
    %cst_17 = arith.constant 0.000000e+00 : f32
    %30 = vector.broadcast %cst_17 : f32 to vector<16x32xf32>
    %31 = arith.maximumf %29, %30 : vector<16x32xf32>
    %32 = arith.addf %18, %31 : vector<16x32xf32>
    %33 = arith.truncf %31 : vector<16x32xf32> to vector<16x32xbf16>
    %cst_18 = arith.constant dense<0.000000e+00> : vector<16x32xf32>
    %34 = tpu.matmul %19, %33, %cst_18 {dimension_numbers = #tpu.dot_dimension_numbers<[1], [0], [0], [1], [0, 0, 1, 1], [], []>} : vector<16x16xbf16>, vector<16x32xbf16>, vector<16x32xf32> -> vector<16x32xf32>
    %35 = arith.addf %34, %31 : vector<16x32xf32>
    %36 = arith.truncf %35 : vector<16x32xf32> to vector<16x32xbf16>
    %c3 = arith.constant 3 : index
    %c0_19 = arith.constant 0 : index
    %c0_20 = arith.constant 0 : index
    %37 = vector.load %arg2[%c3, %c0_19, %c0_20] : memref<5x32x32xbf16, #tpu.memory_space<vmem>>, vector<1x32x32xbf16>
    %38 = vector.shape_cast %37 : vector<1x32x32xbf16> to vector<32x32xbf16>
    %cst_21 = arith.constant dense<0.000000e+00> : vector<16x32xf32>
    %39 = tpu.matmul %36, %38, %cst_21 {dimension_numbers = #tpu.dot_dimension_numbers<[1], [0], [0], [1], [0, 0, 1, 1], [], []>} : vector<16x32xbf16>, vector<32x32xbf16>, vector<16x32xf32> -> vector<16x32xf32>
    %40 = vector.extract_strided_slice %0 {offsets = [3, 0], sizes = [1, 32], strides = [1, 1]} : vector<8x128xf32> to vector<1x32xf32>
    %41 = vector.broadcast %40 : vector<1x32xf32> to vector<16x32xf32>
    %42 = arith.addf %39, %41 : vector<16x32xf32>
    %cst_22 = arith.constant 0.000000e+00 : f32
    %43 = vector.broadcast %cst_22 : f32 to vector<16x32xf32>
    %44 = arith.maximumf %42, %43 : vector<16x32xf32>
    %45 = arith.addf %32, %44 : vector<16x32xf32>
    %46 = arith.truncf %44 : vector<16x32xf32> to vector<16x32xbf16>
    %cst_23 = arith.constant dense<0.000000e+00> : vector<16x32xf32>
    %47 = tpu.matmul %19, %46, %cst_23 {dimension_numbers = #tpu.dot_dimension_numbers<[1], [0], [0], [1], [0, 0, 1, 1], [], []>} : vector<16x16xbf16>, vector<16x32xbf16>, vector<16x32xf32> -> vector<16x32xf32>
    %48 = arith.addf %47, %44 : vector<16x32xf32>
    %49 = arith.truncf %48 : vector<16x32xf32> to vector<16x32xbf16>
    %c4 = arith.constant 4 : index
    %c0_24 = arith.constant 0 : index
    %c0_25 = arith.constant 0 : index
    %50 = vector.load %arg2[%c4, %c0_24, %c0_25] : memref<5x32x32xbf16, #tpu.memory_space<vmem>>, vector<1x32x32xbf16>
    %51 = vector.shape_cast %50 : vector<1x32x32xbf16> to vector<32x32xbf16>
    %cst_26 = arith.constant dense<0.000000e+00> : vector<16x32xf32>
    %52 = tpu.matmul %49, %51, %cst_26 {dimension_numbers = #tpu.dot_dimension_numbers<[1], [0], [0], [1], [0, 0, 1, 1], [], []>} : vector<16x32xbf16>, vector<32x32xbf16>, vector<16x32xf32> -> vector<16x32xf32>
    %53 = vector.extract_strided_slice %0 {offsets = [4, 0], sizes = [1, 32], strides = [1, 1]} : vector<8x128xf32> to vector<1x32xf32>
    %54 = vector.broadcast %53 : vector<1x32xf32> to vector<16x32xf32>
    %55 = arith.addf %52, %54 : vector<16x32xf32>
    %cst_27 = arith.constant 0.000000e+00 : f32
    %56 = vector.broadcast %cst_27 : f32 to vector<16x32xf32>
    %57 = arith.maximumf %55, %56 : vector<16x32xf32>
    %58 = arith.addf %45, %57 : vector<16x32xf32>
    %59 = arith.truncf %58 : vector<16x32xf32> to vector<16x32xbf16>
    %c0_28 = arith.constant 0 : index
    %c0_29 = arith.constant 0 : index
    %60 = vector.load %arg3[%c0_28, %c0_29] : memref<32x128xbf16, #tpu.memory_space<vmem>>, vector<32x128xbf16>
    %cst_30 = arith.constant dense<0.000000e+00> : vector<16x128xf32>
    %61 = tpu.matmul %59, %60, %cst_30 {dimension_numbers = #tpu.dot_dimension_numbers<[1], [0], [0], [1], [0, 0, 1, 1], [], []>} : vector<16x32xbf16>, vector<32x128xbf16>, vector<16x128xf32> -> vector<16x128xf32>
    %62 = vector.extract_strided_slice %0 {offsets = [5, 0], sizes = [1, 128], strides = [1, 1]} : vector<8x128xf32> to vector<1x128xf32>
    %63 = vector.broadcast %62 : vector<1x128xf32> to vector<16x128xf32>
    %64 = arith.addf %61, %63 : vector<16x128xf32>
    %c0_31 = arith.constant 0 : index
    %c0_32 = arith.constant 0 : index
    %65 = vector.load %arg5[%c0_31, %c0_32] : memref<16x128xf32, #tpu.memory_space<vmem>>, vector<16x128xf32>
    tpu.vector_store %arg5[%c0_31, %c0_32], %64 {strides = array<i32>} : memref<16x128xf32, #tpu.memory_space<vmem>>, vector<16x128xf32>,
    return
  }
}

</mosaic_0001>

<llo_original>
// kernel: gin_forward.1
$region0: #{gin_forward.1}
  #allocation0 [shape = 'u32[]', space=smem, size = 0x4, offset = 0x4, fixed_abs, tag = 'smem constant byte address 0x4 - core index']
  #allocation1 [shape = 'u32[144,128]{1,0:T(1,128)}', space=vmem, size = 0x12000, scoped, tag = 'internal scratch']
  %s0 = inlined_call_operand.vmem [shape: bf16[16,32], index: 0, kind: input, shape index: {}]
  %s1 = inlined_call_operand.vmem [shape: bf16[16,16], index: 1, kind: input, shape index: {}]
  %s2 = inlined_call_operand.hbm [shape: bf16[5,32,32], index: 2, kind: input, shape index: {}]
  %s3 = inlined_call_operand.vmem [shape: bf16[32,128], index: 3, kind: input, shape index: {}]
  %s4 = inlined_call_operand.vmem [shape: f32[8,128], index: 4, kind: input, shape index: {}]
  %s5 = inlined_call_operand.vmem [shape: f32[16,128], index: 5, kind: output, shape index: {}]
  %s6 = sld [smem:[#allocation0]]
  $region34: #{gin_forward.1} parent=0
    _
  %s8 = ssub.s32 1, %s6
  %s9 = scalar_select 0, %s8, %s6
  $region1: #{gin_forward.1} parent=0
    #allocation2 [shape = 'u8[40960]{0}', space=vmem, size = 0xa000, scoped, tag = 'input window, operand 2, single buffered']
    #allocation3 [shape = 's32[1]{0}', space=sflag, size = 0x4, scoped, tag = 'scoped memory for gin_forward.1']
    %10 = vsyncpa [#allocation3], 0
    // Predicated region
    $region2: #{gin_forward.1} parent=1 // pred_check
      _
    $region3: #{gin_forward.1} parent=1 // pred_check_branch
      %12 = sbr.rel (0) target = $region5
    $region4: #{gin_forward.1} parent=1 // pred_region
      _
    $region5: #{gin_forward.1} parent=1 // pred_fallthru
      _
    // Predicated region
    $region6: #{gin_forward.1} parent=1 // pred_check
      _
    $region7: #{gin_forward.1} parent=1 // pred_check_branch
      %14 = sbr.rel (0) target = $region9
    $region8: #{gin_forward.1} parent=1 // pred_region
      _
    $region9: #{gin_forward.1} parent=1 // pred_fallthru
      _
    // Predicated region
    $region10: #{gin_forward.1} parent=1 // pred_check
      _
    $region11: #{gin_forward.1} parent=1 // pred_check_branch
      %16 = sbr.rel (0) target = $region13
    $region12: #{gin_forward.1} parent=1 // pred_region
      %s18 = ssub.s32 1280, 1280
      %19 = vsyncadd [#allocation3], %s18
      %s20 = sshll.u32 [#allocation2], 4
      %s21 = int_to_ptr.vmem [resolvable:$true] %s20
      %26 = dma.hbm_to_vmem [thread:$0]  %s2, 1280, %s21, [#allocation3], 64, 64, 4
    $region13: #{gin_forward.1} parent=1 // pred_fallthru
      _
    // Predicated region
    $region14: #{gin_forward.1} parent=1 // pred_check
      _
    $region15: #{gin_forward.1} parent=1 // pred_check_branch
      %28 = sbr.rel (0) target = $region17
    $region16: #{gin_forward.1} parent=1 // pred_region
      _
    $region17: #{gin_forward.1} parent=1 // pred_fallthru
      _
    // Predicated region
    $region18: #{gin_forward.1} parent=1 // pred_check
      _
    $region19: #{gin_forward.1} parent=1 // pred_check_branch
      %30 = sbr.rel (0) target = $region21
    $region20: #{gin_forward.1} parent=1 // pred_region
      _
    $region21: #{gin_forward.1} parent=1 // pred_fallthru
      _
    // Predicated region
    $region22: #{gin_forward.1} parent=1 // pred_check
      _
    $region23: #{gin_forward.1} parent=1 // pred_check_branch
      %32 = sbr.rel (0) target = $region25
    $region24: #{gin_forward.1} parent=1 // pred_region
      %33 = dma.done [#allocation3], 1280
    $region25: #{gin_forward.1} parent=1 // pred_fallthru
      _
    %v35 = vld [vmem:[%s4] sm:$0xff]
    %v36 = vld [vmem:[%s0] sm:$0xf]
    %v37 = vld [vmem:[%s0 + $0x4] sm:$0xf]
    %v38 = vld [vmem:[#allocation2] sm:$0xf]
    %v39 = vld [vmem:[#allocation2 + $0x4] sm:$0xf]
    %v40 = vld [vmem:[#allocation2 + $0x8] sm:$0xf]
    %v41 = vld [vmem:[#allocation2 + $0xc] sm:$0xf]
    %v42 = vlaneseq
    %v43 = vshrl.u32 %v42, 7
    %v44 = vsub.s32 0, %v43
    %v45 = vrot.slane %v35, %v44
    %v48 = vunpack.c.l.b16 %v36
    %v49 = vunpack.c.l.b16 %v37
    %v50 = vpack.c.b16 %v49, %v48
    %v55 = vunpack.c.l.b16 %v38
    %v56 = vunpack.c.l.b16 %v39
    %v57 = vunpack.c.l.b16 %v40
    %v58 = vunpack.c.l.b16 %v41
    %v59 = vpack.c.b16 %v56, %v55
    %v60 = vpack.c.b16 %v58, %v57
    %vm63 = vcmask 261120
    %v65 = vsel %vm63, %v50, 0
    %67 = vmatprep.subr.bf16.mxu0 0
    %68 = vmatpush1.bf16.msra.mxu0 0
    %69 = vmatprep.subr.bf16.mxu0 0
    %70 = vmatpush1.bf16.msra.mxu0 0
    %71 = vmatprep.subr.bf16.mxu0 0
    %72 = vmatpush1.bf16.msra.mxu0 0
    %73 = vmatprep.subr.bf16.mxu0 0
    %74 = vmatpush1.bf16.msra.mxu0 0
    %75 = vmatprep.subr.bf16.mxu0 0
    %76 = vmatpush1.bf16.msra.mxu0 0
    %77 = vmatprep.subr.bf16.mxu0 0
    %78 = vmatpush1.bf16.msra.mxu0 0
    %79 = vmatprep.subr.bf16.mxu0 0
    %80 = vmatpush1.bf16.msra.mxu0 %v60
    %81 = vmatprep.subr.bf16.mxu0 0
    %82 = vmatpush1.bf16.msra.mxu0 %v59
    %83 = vmatprep.subr.bf16.mxu0 0
    %84 = vmatpush2.bf16.msra.mxu0 0
    %85 = vmatprep.subr.bf16.mxu0 0
    %86 = vmatpush2.bf16.msra.mxu0 0
    %87 = vmatprep.subr.bf16.mxu0 0
    %88 = vmatpush2.bf16.msra.mxu0 0
    %89 = vmatprep.subr.bf16.mxu0 0
    %90 = vmatpush2.bf16.msra.mxu0 0
    %91 = vmatprep.subr.bf16.mxu0 0
    %92 = vmatpush2.bf16.msra.mxu0 0
    %93 = vmatprep.subr.bf16.mxu0 0
    %94 = vmatpush2.bf16.msra.mxu0 0
    %95 = vmatprep.subr.bf16.mxu0 0
    %96 = vmatpush2.bf16.msra.mxu0 0
    %97 = vmatprep.subr.bf16.mxu0 0
    %98 = vmatpush2.bf16.msra.mxu0 0
    %99 = vmatprep.mubr.bf16.mxu0 0
    %100 = vmatmul.mubr.bf16.gmra.mxu0 %v65
    %v101 = vpop.f32.mrf.mxu0
    %v102 = vadd.f32 %v45, %v101
    %v103 = vpop.f32.mrf.mxu0
    %v104 = vpop.f32.mrf.mxu0
    %v105 = vadd.f32 %v45, %v104
    %v106 = vpop.f32.mrf.mxu0
    %107 = vdwg.mxu0
    %v108 = vmax.f32 %v102, 0.0
    %v109 = vmax.f32 %v105, 0.0
    %v110 = vpack.c.bf16 %v109, %v108
    %s111 = scalar_lea.vmem [#allocation2], 16
    %v112 = vld [vmem:[%s111] sm:$0xf]
    %v113 = vld [vmem:[%s111 + $0x4] sm:$0xf]
    %v114 = vld [vmem:[%s111 + $0x8] sm:$0xf]
    %v115 = vld [vmem:[%s111 + $0xc] sm:$0xf]
    %v116 = vlaneseq
    %v117 = vshrl.u32 %v116, 7
    %v118 = vsub.s32 1, %v117
    %v119 = vrot.slane %v35, %v118
    %v124 = vunpack.c.l.b16 %v112
    %v125 = vunpack.c.l.b16 %v113
    %v126 = vunpack.c.l.b16 %v114
    %v127 = vunpack.c.l.b16 %v115
    %v128 = vpack.c.b16 %v125, %v124
    %v129 = vpack.c.b16 %v127, %v126
    %v133 = vsel %vm63, %v110, 0
    %135 = vmatprep.subr.bf16.mxu0 0
    %136 = vmatpush1.bf16.msra.mxu0 0
    %137 = vmatprep.subr.bf16.mxu0 0
    %138 = vmatpush1.bf16.msra.mxu0 0
    %139 = vmatprep.subr.bf16.mxu0 0
    %140 = vmatpush1.bf16.msra.mxu0 0
    %141 = vmatprep.subr.bf16.mxu0 0
    %142 = vmatpush1.bf16.msra.mxu0 0
    %143 = vmatprep.subr.bf16.mxu0 0
    %144 = vmatpush1.bf16.msra.mxu0 0
    %145 = vmatprep.subr.bf16.mxu0 0
    %146 = vmatpush1.bf16.msra.mxu0 0
    %147 = vmatprep.subr.bf16.mxu0 0
    %148 = vmatpush1.bf16.msra.mxu0 %v129
    %149 = vmatprep.subr.bf16.mxu0 0
    %150 = vmatpush1.bf16.msra.mxu0 %v128
    %151 = vmatprep.subr.bf16.mxu0 0
    %152 = vmatpush2.bf16.msra.mxu0 0
    %153 = vmatprep.subr.bf16.mxu0 0
    %154 = vmatpush2.bf16.msra.mxu0 0
    %155 = vmatprep.subr.bf16.mxu0 0
    %156 = vmatpush2.bf16.msra.mxu0 0
    %157 = vmatprep.subr.bf16.mxu0 0
    %158 = vmatpush2.bf16.msra.mxu0 0
    %159 = vmatprep.subr.bf16.mxu0 0
    %160 = vmatpush2.bf16.msra.mxu0 0
    %161 = vmatprep.subr.bf16.mxu0 0
    %162 = vmatpush2.bf16.msra.mxu0 0
    %163 = vmatprep.subr.bf16.mxu0 0
    %164 = vmatpush2.bf16.msra.mxu0 0
    %165 = vmatprep.subr.bf16.mxu0 0
    %166 = vmatpush2.bf16.msra.mxu0 0
    %167 = vmatprep.mubr.bf16.mxu0 0
    %168 = vmatmul.mubr.bf16.gmra.mxu0 %v133
    %v169 = vpop.f32.mrf.mxu0
    %v170 = vadd.f32 %v119, %v169
    %v171 = vpop.f32.mrf.mxu0
    %v172 = vpop.f32.mrf.mxu0
    %v173 = vadd.f32 %v119, %v172
    %v174 = vpop.f32.mrf.mxu0
    %175 = vdwg.mxu0
    %v176 = vmax.f32 %v170, 0.0
    %v177 = vmax.f32 %v173, 0.0
    %v178 = vld [vmem:[%s1] sm:$0xf]
    %v179 = vld [vmem:[%s1 + $0x4] sm:$0xf]
    %v180 = vpack.c.bf16 %v177, %v176
    %v183 = vunpack.c.l.b16 %v178
    %v184 = vunpack.c.l.b16 %v179
    %v185 = vpack.c.b16 %v184, %v183
    %vm186 = vcmask 130048
    %v188 = vsel %vm186, %v185, 0
    %190 = vmatprep.subr.bf16.mxu0 0
    %191 = vmatpush1.bf16.msra.mxu0 0
    %192 = vmatprep.subr.bf16.mxu0 0
    %193 = vmatpush1.bf16.msra.mxu0 0
    %194 = vmatprep.subr.bf16.mxu0 0
    %195 = vmatpush1.bf16.msra.mxu0 0
    %196 = vmatprep.subr.bf16.mxu0 0
    %197 = vmatpush1.bf16.msra.mxu0 0
    %198 = vmatprep.subr.bf16.mxu0 0
    %199 = vmatpush1.bf16.msra.mxu0 0
    %200 = vmatprep.subr.bf16.mxu0 0
    %201 = vmatpush1.bf16.msra.mxu0 0
    %202 = vmatprep.subr.bf16.mxu0 0
    %203 = vmatpush1.bf16.msra.mxu0 0
    %204 = vmatprep.subr.bf16.mxu0 0
    %205 = vmatpush1.bf16.msra.mxu0 %v180
    %206 = vmatprep.subr.bf16.mxu0 0
    %207 = vmatpush2.bf16.msra.mxu0 0
    %208 = vmatprep.subr.bf16.mxu0 0
    %209 = vmatpush2.bf16.msra.mxu0 0
    %210 = vmatprep.subr.bf16.mxu0 0
    %211 = vmatpush2.bf16.msra.mxu0 0
    %212 = vmatprep.subr.bf16.mxu0 0
    %213 = vmatpush2.bf16.msra.mxu0 0
    %214 = vmatprep.subr.bf16.mxu0 0
    %215 = vmatpush2.bf16.msra.mxu0 0
    %216 = vmatprep.subr.bf16.mxu0 0
    %217 = vmatpush2.bf16.msra.mxu0 0
    %218 = vmatprep.subr.bf16.mxu0 0
    %219 = vmatpush2.bf16.msra.mxu0 0
    %220 = vmatprep.subr.bf16.mxu0 0
    %221 = vmatpush2.bf16.msra.mxu0 0
    %222 = vmatprep.mubr.bf16.mxu0 0
    %223 = vmatmul.mubr.bf16.gmra.mxu0 %v188
    %v224 = vpop.f32.mrf.mxu0
    %v225 = vadd.f32 %v176, %v224
    %v226 = vpop.f32.mrf.mxu0
    %v227 = vpop.f32.mrf.mxu0
    %v228 = vadd.f32 %v177, %v227
    %v229 = vpop.f32.mrf.mxu0
    %230 = vdwg.mxu0
    %v231 = vpack.c.bf16 %v228, %v225
    %s232 = scalar_lea.vmem [#allocation2], 32
    %v233 = vld [vmem:[%s232] sm:$0xf]
    %v234 = vld [vmem:[%s232 + $0x4] sm:$0xf]
    %v235 = vld [vmem:[%s232 + $0x8] sm:$0xf]
    %v236 = vld [vmem:[%s232 + $0xc] sm:$0xf]
    %v237 = vlaneseq
    %v238 = vshrl.u32 %v237, 7
    %v239 = vsub.s32 2, %v238
    %v240 = vrot.slane %v35, %v239
    %v245 = vunpack.c.l.b16 %v233
    %v246 = vunpack.c.l.b16 %v234
    %v247 = vunpack.c.l.b16 %v235
    %v248 = vunpack.c.l.b16 %v236
    %v249 = vpack.c.b16 %v246, %v245
    %v250 = vpack.c.b16 %v248, %v247
    %v254 = vsel %vm63, %v231, 0
    %256 = vmatprep.subr.bf16.mxu0 0
    %257 = vmatpush1.bf16.msra.mxu0 0
    %258 = vmatprep.subr.bf16.mxu0 0
    %259 = vmatpush1.bf16.msra.mxu0 0
    %260 = vmatprep.subr.bf16.mxu0 0
    %261 = vmatpush1.bf16.msra.mxu0 0
    %262 = vmatprep.subr.bf16.mxu0 0
    %263 = vmatpush1.bf16.msra.mxu0 0
    %264 = vmatprep.subr.bf16.mxu0 0
    %265 = vmatpush1.bf16.msra.mxu0 0
    %266 = vmatprep.subr.bf16.mxu0 0
    %267 = vmatpush1.bf16.msra.mxu0 0
    %268 = vmatprep.subr.bf16.mxu0 0
    %269 = vmatpush1.bf16.msra.mxu0 %v250
    %270 = vmatprep.subr.bf16.mxu0 0
    %271 = vmatpush1.bf16.msra.mxu0 %v249
    %272 = vmatprep.subr.bf16.mxu0 0
    %273 = vmatpush2.bf16.msra.mxu0 0
    %274 = vmatprep.subr.bf16.mxu0 0
    %275 = vmatpush2.bf16.msra.mxu0 0
    %276 = vmatprep.subr.bf16.mxu0 0
    %277 = vmatpush2.bf16.msra.mxu0 0
    %278 = vmatprep.subr.bf16.mxu0 0
    %279 = vmatpush2.bf16.msra.mxu0 0
    %280 = vmatprep.subr.bf16.mxu0 0
    %281 = vmatpush2.bf16.msra.mxu0 0
    %282 = vmatprep.subr.bf16.mxu0 0
    %283 = vmatpush2.bf16.msra.mxu0 0
    %284 = vmatprep.subr.bf16.mxu0 0
    %285 = vmatpush2.bf16.msra.mxu0 0
    %286 = vmatprep.subr.bf16.mxu0 0
    %287 = vmatpush2.bf16.msra.mxu0 0
    %288 = vmatprep.mubr.bf16.mxu0 0
    %289 = vmatmul.mubr.bf16.gmra.mxu0 %v254
    %v290 = vpop.f32.mrf.mxu0
    %v291 = vadd.f32 %v240, %v290
    %v292 = vpop.f32.mrf.mxu0
    %v293 = vpop.f32.mrf.mxu0
    %v294 = vadd.f32 %v240, %v293
    %v295 = vpop.f32.mrf.mxu0
    %296 = vdwg.mxu0
    %v297 = vmax.f32 %v291, 0.0
    %v298 = vmax.f32 %v294, 0.0
    %v299 = vadd.f32 %v176, %v297
    %v300 = vadd.f32 %v177, %v298
    %v301 = vpack.c.bf16 %v298, %v297
    %302 = vmatprep.subr.bf16.mxu0 0
    %303 = vmatpush1.bf16.msra.mxu0 0
    %304 = vmatprep.subr.bf16.mxu0 0
    %305 = vmatpush1.bf16.msra.mxu0 0
    %306 = vmatprep.subr.bf16.mxu0 0
    %307 = vmatpush1.bf16.msra.mxu0 0
    %308 = vmatprep.subr.bf16.mxu0 0
    %309 = vmatpush1.bf16.msra.mxu0 0
    %310 = vmatprep.subr.bf16.mxu0 0
    %311 = vmatpush1.bf16.msra.mxu0 0
    %312 = vmatprep.subr.bf16.mxu0 0
    %313 = vmatpush1.bf16.msra.mxu0 0
    %314 = vmatprep.subr.bf16.mxu0 0
    %315 = vmatpush1.bf16.msra.mxu0 0
    %316 = vmatprep.subr.bf16.mxu0 0
    %317 = vmatpush1.bf16.msra.mxu0 %v301
    %318 = vmatprep.subr.bf16.mxu0 0
    %319 = vmatpush2.bf16.msra.mxu0 0
    %320 = vmatprep.subr.bf16.mxu0 0
    %321 = vmatpush2.bf16.msra.mxu0 0
    %322 = vmatprep.subr.bf16.mxu0 0
    %323 = vmatpush2.bf16.msra.mxu0 0
    %324 = vmatprep.subr.bf16.mxu0 0
    %325 = vmatpush2.bf16.msra.mxu0 0
    %326 = vmatprep.subr.bf16.mxu0 0
    %327 = vmatpush2.bf16.msra.mxu0 0
    %328 = vmatprep.subr.bf16.mxu0 0
    %329 = vmatpush2.bf16.msra.mxu0 0
    %330 = vmatprep.subr.bf16.mxu0 0
    %331 = vmatpush2.bf16.msra.mxu0 0
    %332 = vmatprep.subr.bf16.mxu0 0
    %333 = vmatpush2.bf16.msra.mxu0 0
    %334 = vmatprep.mubr.bf16.mxu0 0
    %335 = vmatmul.mubr.bf16.gmra.mxu0 %v188
    %v336 = vpop.f32.mrf.mxu0
    %v337 = vadd.f32 %v297, %v336
    %v338 = vpop.f32.mrf.mxu0
    %v339 = vpop.f32.mrf.mxu0
    %v340 = vadd.f32 %v298, %v339
    %v341 = vpop.f32.mrf.mxu0
    %342 = vdwg.mxu0
    %v343 = vpack.c.bf16 %v340, %v337
    %s344 = scalar_lea.vmem [#allocation2], 48
    %v345 = vld [vmem:[%s344] sm:$0xf]
    %v346 = vld [vmem:[%s344 + $0x4] sm:$0xf]
    %v347 = vld [vmem:[%s344 + $0x8] sm:$0xf]
    %v348 = vld [vmem:[%s344 + $0xc] sm:$0xf]
    %v349 = vlaneseq
    %v350 = vshrl.u32 %v349, 7
    %v351 = vsub.s32 3, %v350
    %v352 = vrot.slane %v35, %v351
    %v357 = vunpack.c.l.b16 %v345
    %v358 = vunpack.c.l.b16 %v346
    %v359 = vunpack.c.l.b16 %v347
    %v360 = vunpack.c.l.b16 %v348
    %v361 = vpack.c.b16 %v358, %v357
    %v362 = vpack.c.b16 %v360, %v359
    %v366 = vsel %vm63, %v343, 0
    %368 = vmatprep.subr.bf16.mxu0 0
    %369 = vmatpush1.bf16.msra.mxu0 0
    %370 = vmatprep.subr.bf16.mxu0 0
    %371 = vmatpush1.bf16.msra.mxu0 0
    %372 = vmatprep.subr.bf16.mxu0 0
    %373 = vmatpush1.bf16.msra.mxu0 0
    %374 = vmatprep.subr.bf16.mxu0 0
    %375 = vmatpush1.bf16.msra.mxu0 0
    %376 = vmatprep.subr.bf16.mxu0 0
    %377 = vmatpush1.bf16.msra.mxu0 0
    %378 = vmatprep.subr.bf16.mxu0 0
    %379 = vmatpush1.bf16.msra.mxu0 0
    %380 = vmatprep.subr.bf16.mxu0 0
    %381 = vmatpush1.bf16.msra.mxu0 %v362
    %382 = vmatprep.subr.bf16.mxu0 0
    %383 = vmatpush1.bf16.msra.mxu0 %v361
    %384 = vmatprep.subr.bf16.mxu0 0
    %385 = vmatpush2.bf16.msra.mxu0 0
    %386 = vmatprep.subr.bf16.mxu0 0
    %387 = vmatpush2.bf16.msra.mxu0 0
    %388 = vmatprep.subr.bf16.mxu0 0
    %389 = vmatpush2.bf16.msra.mxu0 0
    %390 = vmatprep.subr.bf16.mxu0 0
    %391 = vmatpush2.bf16.msra.mxu0 0
    %392 = vmatprep.subr.bf16.mxu0 0
    %393 = vmatpush2.bf16.msra.mxu0 0
    %394 = vmatprep.subr.bf16.mxu0 0
    %395 = vmatpush2.bf16.msra.mxu0 0
    %396 = vmatprep.subr.bf16.mxu0 0
    %397 = vmatpush2.bf16.msra.mxu0 0
    %398 = vmatprep.subr.bf16.mxu0 0
    %399 = vmatpush2.bf16.msra.mxu0 0
    %400 = vmatprep.mubr.bf16.mxu0 0
    %401 = vmatmul.mubr.bf16.gmra.mxu0 %v366
    %v402 = vpop.f32.mrf.mxu0
    %v403 = vadd.f32 %v352, %v402
    %v404 = vpop.f32.mrf.mxu0
    %v405 = vpop.f32.mrf.mxu0
    %v406 = vadd.f32 %v352, %v405
    %v407 = vpop.f32.mrf.mxu0
    %408 = vdwg.mxu0
    %v409 = vmax.f32 %v403, 0.0
    %v410 = vmax.f32 %v406, 0.0
    %v411 = vadd.f32 %v299, %v409
    %v412 = vadd.f32 %v300, %v410
    %v413 = vpack.c.bf16 %v410, %v409
    %414 = vmatprep.subr.bf16.mxu0 0
    %415 = vmatpush1.bf16.msra.mxu0 0
    %416 = vmatprep.subr.bf16.mxu0 0
    %417 = vmatpush1.bf16.msra.mxu0 0
    %418 = vmatprep.subr.bf16.mxu0 0
    %419 = vmatpush1.bf16.msra.mxu0 0
    %420 = vmatprep.subr.bf16.mxu0 0
    %421 = vmatpush1.bf16.msra.mxu0 0
    %422 = vmatprep.subr.bf16.mxu0 0
    %423 = vmatpush1.bf16.msra.mxu0 0
    %424 = vmatprep.subr.bf16.mxu0 0
    %425 = vmatpush1.bf16.msra.mxu0 0
    %426 = vmatprep.subr.bf16.mxu0 0
    %427 = vmatpush1.bf16.msra.mxu0 0
    %428 = vmatprep.subr.bf16.mxu0 0
    %429 = vmatpush1.bf16.msra.mxu0 %v413
    %430 = vmatprep.subr.bf16.mxu0 0
    %431 = vmatpush2.bf16.msra.mxu0 0
    %432 = vmatprep.subr.bf16.mxu0 0
    %433 = vmatpush2.bf16.msra.mxu0 0
    %434 = vmatprep.subr.bf16.mxu0 0
    %435 = vmatpush2.bf16.msra.mxu0 0
    %436 = vmatprep.subr.bf16.mxu0 0
    %437 = vmatpush2.bf16.msra.mxu0 0
    %438 = vmatprep.subr.bf16.mxu0 0
    %439 = vmatpush2.bf16.msra.mxu0 0
    %440 = vmatprep.subr.bf16.mxu0 0
    %441 = vmatpush2.bf16.msra.mxu0 0
    %442 = vmatprep.subr.bf16.mxu0 0
    %443 = vmatpush2.bf16.msra.mxu0 0
    %444 = vmatprep.subr.bf16.mxu0 0
    %445 = vmatpush2.bf16.msra.mxu0 0
    %446 = vmatprep.mubr.bf16.mxu0 0
    %447 = vmatmul.mubr.bf16.gmra.mxu0 %v188
    %v448 = vpop.f32.mrf.mxu0
    %v449 = vadd.f32 %v409, %v448
    %v450 = vpop.f32.mrf.mxu0
    %v451 = vpop.f32.mrf.mxu0
    %v452 = vadd.f32 %v410, %v451
    %v453 = vpop.f32.mrf.mxu0
    %454 = vdwg.mxu0
    %v455 = vpack.c.bf16 %v452, %v449
    %s456 = scalar_lea.vmem [#allocation2], 64
    %v457 = vld [vmem:[%s456] sm:$0xf]
    %v458 = vld [vmem:[%s456 + $0x4] sm:$0xf]
    %v459 = vld [vmem:[%s456 + $0x8] sm:$0xf]
    %v460 = vld [vmem:[%s456 + $0xc] sm:$0xf]
    %v461 = vlaneseq
    %v462 = vshrl.u32 %v461, 7
    %v463 = vsub.s32 4, %v462
    %v464 = vrot.slane %v35, %v463
    %v469 = vunpack.c.l.b16 %v457
    %v470 = vunpack.c.l.b16 %v458
    %v471 = vunpack.c.l.b16 %v459
    %v472 = vunpack.c.l.b16 %v460
    %v473 = vpack.c.b16 %v470, %v469
    %v474 = vpack.c.b16 %v472, %v471
    %v478 = vsel %vm63, %v455, 0
    %480 = vmatprep.subr.bf16.mxu0 0
    %481 = vmatpush1.bf16.msra.mxu0 0
    %482 = vmatprep.subr.bf16.mxu0 0
    %483 = vmatpush1.bf16.msra.mxu0 0
    %484 = vmatprep.subr.bf16.mxu0 0
    %485 = vmatpush1.bf16.msra.mxu0 0
    %486 = vmatprep.subr.bf16.mxu0 0
    %487 = vmatpush1.bf16.msra.mxu0 0
    %488 = vmatprep.subr.bf16.mxu0 0
    %489 = vmatpush1.bf16.msra.mxu0 0
    %490 = vmatprep.subr.bf16.mxu0 0
    %491 = vmatpush1.bf16.msra.mxu0 0
    %492 = vmatprep.subr.bf16.mxu0 0
    %493 = vmatpush1.bf16.msra.mxu0 %v474
    %494 = vmatprep.subr.bf16.mxu0 0
    %495 = vmatpush1.bf16.msra.mxu0 %v473
    %496 = vmatprep.subr.bf16.mxu0 0
    %497 = vmatpush2.bf16.msra.mxu0 0
    %498 = vmatprep.subr.bf16.mxu0 0
    %499 = vmatpush2.bf16.msra.mxu0 0
    %500 = vmatprep.subr.bf16.mxu0 0
    %501 = vmatpush2.bf16.msra.mxu0 0
    %502 = vmatprep.subr.bf16.mxu0 0
    %503 = vmatpush2.bf16.msra.mxu0 0
    %504 = vmatprep.subr.bf16.mxu0 0
    %505 = vmatpush2.bf16.msra.mxu0 0
    %506 = vmatprep.subr.bf16.mxu0 0
    %507 = vmatpush2.bf16.msra.mxu0 0
    %508 = vmatprep.subr.bf16.mxu0 0
    %509 = vmatpush2.bf16.msra.mxu0 0
    %510 = vmatprep.subr.bf16.mxu0 0
    %511 = vmatpush2.bf16.msra.mxu0 0
    %512 = vmatprep.mubr.bf16.mxu0 0
    %513 = vmatmul.mubr.bf16.gmra.mxu0 %v478
    %v514 = vpop.f32.mrf.mxu0
    %v515 = vadd.f32 %v464, %v514
    %v516 = vpop.f32.mrf.mxu0
    %v517 = vpop.f32.mrf.mxu0
    %v518 = vadd.f32 %v464, %v517
    %v519 = vpop.f32.mrf.mxu0
    %520 = vdwg.mxu0
    %v521 = vmax.f32 %v515, 0.0
    %v522 = vmax.f32 %v518, 0.0
    %v523 = vadd.f32 %v411, %v521
    %v524 = vadd.f32 %v412, %v522
    %v525 = vpack.c.bf16 %v524, %v523
    %v526 = vld [vmem:[%s3] sm:$0xf]
    %v527 = vld [vmem:[%s3 + $0x4] sm:$0xf]
    %v528 = vld [vmem:[%s3 + $0x8] sm:$0xf]
    %v529 = vld [vmem:[%s3 + $0xc] sm:$0xf]
    %v530 = vlaneseq
    %v531 = vshrl.u32 %v530, 7
    %v532 = vsub.s32 5, %v531
    %v533 = vrot.slane %v35, %v532
    %v538 = vunpack.c.l.b16 %v526
    %v539 = vunpack.c.l.b16 %v527
    %v540 = vunpack.c.l.b16 %v528
    %v541 = vunpack.c.l.b16 %v529
    %v542 = vpack.c.b16 %v539, %v538
    %v543 = vpack.c.b16 %v541, %v540
    %v547 = vsel %vm63, %v525, 0
    %549 = vmatprep.subr.bf16.mxu0 0
    %550 = vmatpush1.bf16.msra.mxu0 0
    %551 = vmatprep.subr.bf16.mxu0 0
    %552 = vmatpush1.bf16.msra.mxu0 0
    %553 = vmatprep.subr.bf16.mxu0 0
    %554 = vmatpush1.bf16.msra.mxu0 0
    %555 = vmatprep.subr.bf16.mxu0 0
    %556 = vmatpush1.bf16.msra.mxu0 0
    %557 = vmatprep.subr.bf16.mxu0 0
    %558 = vmatpush1.bf16.msra.mxu0 0
    %559 = vmatprep.subr.bf16.mxu0 0
    %560 = vmatpush1.bf16.msra.mxu0 0
    %561 = vmatprep.subr.bf16.mxu0 0
    %562 = vmatpush1.bf16.msra.mxu0 %v543
    %563 = vmatprep.subr.bf16.mxu0 0
    %564 = vmatpush1.bf16.msra.mxu0 %v542
    %565 = vmatprep.subr.bf16.mxu0 0
    %566 = vmatpush2.bf16.msra.mxu0 0
    %567 = vmatprep.subr.bf16.mxu0 0
    %568 = vmatpush2.bf16.msra.mxu0 0
    %569 = vmatprep.subr.bf16.mxu0 0
    %570 = vmatpush2.bf16.msra.mxu0 0
    %571 = vmatprep.subr.bf16.mxu0 0
    %572 = vmatpush2.bf16.msra.mxu0 0
    %573 = vmatprep.subr.bf16.mxu0 0
    %574 = vmatpush2.bf16.msra.mxu0 0
    %575 = vmatprep.subr.bf16.mxu0 0
    %576 = vmatpush2.bf16.msra.mxu0 0
    %577 = vmatprep.subr.bf16.mxu0 0
    %578 = vmatpush2.bf16.msra.mxu0 0
    %579 = vmatprep.subr.bf16.mxu0 0
    %580 = vmatpush2.bf16.msra.mxu0 0
    %581 = vmatprep.mubr.bf16.mxu0 0
    %582 = vmatmul.mubr.bf16.gmra.mxu0 %v547
    %v583 = vpop.f32.mrf.mxu0
    %v584 = vadd.f32 %v533, %v583
    %v585 = vpop.f32.mrf.mxu0
    %v586 = vpop.f32.mrf.mxu0
    %v587 = vadd.f32 %v533, %v586
    %v588 = vpop.f32.mrf.mxu0
    %589 = vdwg.mxu0
    %590 = vst [vmem:[%s5] sm:$0xff] %v584
    %591 = vst [vmem:[%s5 + $0x8] sm:$0xff] %v587
    // Predicated region
    $region26: #{gin_forward.1} parent=1 // pred_check
      _
    $region27: #{gin_forward.1} parent=1 // pred_check_branch
      %593 = sbr.rel (0) target = $region29
    $region28: #{gin_forward.1} parent=1 // pred_region
      _
    $region29: #{gin_forward.1} parent=1 // pred_fallthru
      _
    // Predicated region
    $region30: #{gin_forward.1} parent=1 // pred_check
      _
    $region31: #{gin_forward.1} parent=1 // pred_check_branch
      %595 = sbr.rel (0) target = $region33
    $region32: #{gin_forward.1} parent=1 // pred_region
      _
    $region33: #{gin_forward.1} parent=1 // pred_fallthru
      _
    %596 = vsyncpa [#allocation3], 1

</llo_original>
